<compile_context>
chip_gen: v6e
topology: v6e:2x2x1
jax: 0.10.0
libtpu: 0.0.40
codegen_flags: <defaults>
</compile_context>

<pallas_src>
import jax
import jax.numpy as jnp
from jax.experimental import pallas as pl
from jax.experimental.pallas import tpu as pltpu

LANE = 128
SUBLANE = 8

_MAX_BATCH_TILE = 1024   # ~85%+ of HBM roofline for streamed tiles, tiny VMEM cost
_SPLIT_THRESHOLD = 512   # above this, split >=2 ways so v7x's two TCs both get work


def _round_up(n, m):
    return ((n + m - 1) // m) * m


def mlp_kernel(x_ref, w1_ref, b1_ref, w2_ref, b2_ref, o_ref):
    # Layer 1 (MXU): h = relu(x @ W1^T + b1). W1 consumed in native PyTorch
    # (out, in) layout by contracting the last dims: (tb, F) x (Hp, F) -> (tb, Hp).
    h = jax.lax.dot_general(
        x_ref[...], w1_ref[...],
        dimension_numbers=(((1,), (1,)), ((), ())),
        preferred_element_type=jnp.float32,
    )
    h = jnp.maximum(h + b1_ref[...], 0.0)  # (tb, Hp); padded lanes stay zero.

    # Layer 2 (MXU): out = h @ W2^T + b2. W2 in native (out, in) layout padded
    # only along the contracted hidden dim: (tb, Hp) x (C, Hp) -> (tb, C).
    # Output is kept at the real C lanes so the HBM writeback is B*C*4 bytes.
    o = jax.lax.dot_general(
        h, w2_ref[...],
        dimension_numbers=(((1,), (1,)), ((), ())),
        preferred_element_type=jnp.float32,
    )
    o_ref[...] = (o + b2_ref[...]).astype(o_ref.dtype)


def prepare_params(w1, b1, w2, b2):
    """One-time layout/pad of PyTorch-layout Net1 params into kernel-ready form.

    w1: (H, F)  b1: (H,)  w2: (C, H)  b2: (C,)   (all float32)
    Only the hidden (contracted) dim is padded to 128 lanes; padded hidden
    lanes are zero in w1/b1/w2, and ReLU(0)=0, so they contribute nothing.
    """
    H, F = w1.shape
    C = w2.shape[0]
    Hp = _round_up(H, LANE)

    w1p = jnp.zeros((Hp, F), jnp.float32).at[:H, :].set(w1.astype(jnp.float32))
    b1p = jnp.zeros((1, Hp), jnp.float32).at[0, :H].set(b1.astype(jnp.float32))
    w2p = jnp.zeros((C, Hp), jnp.float32).at[:, :H].set(w2.astype(jnp.float32))
    b2p = b2.astype(jnp.float32).reshape(1, C)

    return dict(w1=w1p, b1=b1p, w2=w2p, b2=b2p, hidden=H, num_classes=C)


def _pick_batch_tile(B):
    if B > _MAX_BATCH_TILE:
        return _MAX_BATCH_TILE
    if B >= _SPLIT_THRESHOLD:
        # Two tiles so the "parallel" batch axis spans both TensorCores on v7x.
        return _round_up(pl.cdiv(B, 2), SUBLANE)
    # Small batch: one grid step minimizes launch/pipeline overhead (v5e/v6e).
    return B


def net1_forward(x, params):
    """Forward pass. x: (B, input_size) f32, params from prepare_params."""
    B, F = x.shape
    C = params["num_classes"]
    w1p, b1p, w2p, b2p = params["w1"], params["b1"], params["w2"], params["b2"]
    Hp = w1p.shape[0]

    tb = _pick_batch_tile(B)
    grid = (pl.cdiv(B, tb),)

    # Self-consistent scheduler hint: padded hidden dim in both matmul terms,
    # real (unpadded) output bytes.
    flops = 2 * B * F * Hp + 2 * B * Hp * C
    bytes_accessed = 4 * (B * F + w1p.size + b1p.size + w2p.size + b2p.size + B * C)

    vmem = pltpu.MemorySpace.VMEM
    out = pl.pallas_call(
        mlp_kernel,
        out_shape=jax.ShapeDtypeStruct((B, C), jnp.float32),
        grid=grid,
        in_specs=[
            pl.BlockSpec((tb, F), lambda i: (i, 0), memory_space=vmem),
            # Weights/biases: constant index_map -> VMEM-resident across the grid.
            pl.BlockSpec(w1p.shape, lambda i: (0, 0), memory_space=vmem),
            pl.BlockSpec(b1p.shape, lambda i: (0, 0), memory_space=vmem),
            pl.BlockSpec(w2p.shape, lambda i: (0, 0), memory_space=vmem),
            pl.BlockSpec(b2p.shape, lambda i: (0, 0), memory_space=vmem),
        ],
        out_specs=pl.BlockSpec((tb, C), lambda i: (i, 0), memory_space=vmem),
        compiler_params=pltpu.CompilerParams(
            dimension_semantics=("parallel",)),
        cost_estimate=pl.CostEstimate(
            flops=flops, transcendentals=0, bytes_accessed=bytes_accessed),
    )(x, w1p, b1p, w2p, b2p)

    return out


def init_net1_params(key, input_size, num_classes, hidden_layer_size=3):
    """Mirror weights_init_normal: weight ~ N(0, 1/sqrt(in_features)), bias = 0."""
    k1, k2 = jax.random.split(key)
    w1 = jax.random.normal(k1, (hidden_layer_size, input_size), jnp.float32) / jnp.sqrt(
        jnp.float32(input_size))
    b1 = jnp.zeros((hidden_layer_size,), jnp.float32)
    w2 = jax.random.normal(k2, (num_classes, hidden_layer_size), jnp.float32) / jnp.sqrt(
        jnp.float32(hidden_layer_size))
    b2 = jnp.zeros((num_classes,), jnp.float32)
    return w1, b1, w2, b2


if __name__ == "__main__":
    key = jax.random.PRNGKey(0)
    k_x, k_p = jax.random.split(key)

    batch = 64
    input_size = 32
    num_classes = 4
    hidden_layer_size = 3  # Net1 default

    x = jax.random.normal(k_x, (batch, input_size), jnp.float32)
    w1, b1, w2, b2 = init_net1_params(k_p, input_size, num_classes, hidden_layer_size)

    # One-time parameter prep (pad / lay out), then the pallas_call hot path.
    params = prepare_params(w1, b1, w2, b2)
    out = net1_forward(x, params)  # B=64 -> single grid step, no padding copies
    out = jax.block_until_ready(out)

    # Pure-JAX reference check (PyTorch semantics).
    ref = jnp.maximum(x @ w1.T + b1, 0.0) @ w2.T + b2
    assert out.shape == (batch, num_classes)
    assert jnp.allclose(out, ref, atol=1e-5, rtol=1e-5)

    print("KERNEL_OK")
</pallas_src>

<mosaic_0001>
module attributes {stable_mosaic.version = 11 : i64} {
  func.func @mlp_kernel(%arg0: i32, %arg1: memref<64x32xf32, #tpu.memory_space<vmem>>, %arg2: memref<128x32xf32, #tpu.memory_space<vmem>>, %arg3: memref<1x128xf32, #tpu.memory_space<vmem>>, %arg4: memref<4x128xf32, #tpu.memory_space<vmem>>, %arg5: memref<1x4xf32, #tpu.memory_space<vmem>>, %arg6: memref<64x4xf32, #tpu.memory_space<vmem>>) attributes {dimension_semantics = [#tpu.dimension_semantics<parallel>], iteration_bounds = array<i64: 1>, scalar_prefetch = 0 : i64, scratch_operands = 0 : i64, tpu.core_type = #tpu.core_type<tc>, window_params = [{transform_indices = @transform_0, window_bounds = array<i64: 64, 32>}, {pipeline_mode = #tpu.pipeline_mode<synchronous>, transform_indices = @transform_1, window_bounds = array<i64: 128, 32>}, {pipeline_mode = #tpu.pipeline_mode<synchronous>, transform_indices = @transform_2, window_bounds = array<i64: 1, 128>}, {pipeline_mode = #tpu.pipeline_mode<synchronous>, transform_indices = @transform_3, window_bounds = array<i64: 4, 128>}, {pipeline_mode = #tpu.pipeline_mode<synchronous>, transform_indices = @transform_4, window_bounds = array<i64: 1, 4>}, {transform_indices = @transform_5, window_bounds = array<i64: 64, 4>}]} {
    %c0 = arith.constant 0 : index
    %c0_0 = arith.constant 0 : index
    %0 = vector.load %arg1[%c0, %c0_0] : memref<64x32xf32, #tpu.memory_space<vmem>>, vector<64x32xf32>
    %c0_1 = arith.constant 0 : index
    %c0_2 = arith.constant 0 : index
    %1 = vector.load %arg2[%c0_1, %c0_2] : memref<128x32xf32, #tpu.memory_space<vmem>>, vector<128x32xf32>
    %cst = arith.constant dense<0.000000e+00> : vector<64x128xf32>
    %2 = tpu.matmul %0, %1, %cst {dimension_numbers = #tpu.dot_dimension_numbers<[1], [1], [0], [0], [0, 0, 1, 0], [], []>} : vector<64x32xf32>, vector<128x32xf32>, vector<64x128xf32> -> vector<64x128xf32>
    %c0_3 = arith.constant 0 : index
    %c0_4 = arith.constant 0 : index
    %3 = vector.load %arg3[%c0_3, %c0_4] : memref<1x128xf32, #tpu.memory_space<vmem>>, vector<1x128xf32>
    %4 = vector.broadcast %3 : vector<1x128xf32> to vector<64x128xf32>
    %5 = arith.addf %2, %4 : vector<64x128xf32>
    %cst_5 = arith.constant 0.000000e+00 : f32
    %6 = vector.broadcast %cst_5 : f32 to vector<64x128xf32>
    %7 = arith.maximumf %5, %6 : vector<64x128xf32>
    %c0_6 = arith.constant 0 : index
    %c0_7 = arith.constant 0 : index
    %8 = vector.load %arg4[%c0_6, %c0_7] : memref<4x128xf32, #tpu.memory_space<vmem>>, vector<4x128xf32>
    %cst_8 = arith.constant dense<0.000000e+00> : vector<64x4xf32>
    %9 = tpu.matmul %7, %8, %cst_8 {dimension_numbers = #tpu.dot_dimension_numbers<[1], [1], [0], [0], [0, 0, 1, 0], [], []>} : vector<64x128xf32>, vector<4x128xf32>, vector<64x4xf32> -> vector<64x4xf32>
    %c0_9 = arith.constant 0 : index
    %c0_10 = arith.constant 0 : index
    %10 = vector.load %arg5[%c0_9, %c0_10] : memref<1x4xf32, #tpu.memory_space<vmem>>, vector<1x4xf32>
    %11 = vector.broadcast %10 : vector<1x4xf32> to vector<64x4xf32>
    %12 = arith.addf %9, %11 : vector<64x4xf32>
    %c0_11 = arith.constant 0 : index
    %c0_12 = arith.constant 0 : index
    %13 = vector.load %arg6[%c0_11, %c0_12] : memref<64x4xf32, #tpu.memory_space<vmem>>, vector<64x4xf32>
    tpu.vector_store %arg6[%c0_11, %c0_12], %12 {strides = array<i32>} : memref<64x4xf32, #tpu.memory_space<vmem>>, vector<64x4xf32>,
    return
  }
  func.func @transform_0(%arg0: i32) -> (i32, i32) {
    %c0_i32 = arith.constant 0 : i32
    %c0_i32_0 = arith.constant 0 : i32
    return %arg0, %c0_i32 : i32, i32
  }
  func.func @transform_1(%arg0: i32) -> (i32, i32) {
    %c0_i32 = arith.constant 0 : i32
    %c0_i32_0 = arith.constant 0 : i32
    %c0_i32_1 = arith.constant 0 : i32
    return %c0_i32, %c0_i32_0 : i32, i32
  }
  func.func @transform_2(%arg0: i32) -> (i32, i32) {
    %c0_i32 = arith.constant 0 : i32
    %c0_i32_0 = arith.constant 0 : i32
    %c0_i32_1 = arith.constant 0 : i32
    return %c0_i32, %c0_i32_0 : i32, i32
  }
  func.func @transform_3(%arg0: i32) -> (i32, i32) {
    %c0_i32 = arith.constant 0 : i32
    %c0_i32_0 = arith.constant 0 : i32
    %c0_i32_1 = arith.constant 0 : i32
    return %c0_i32, %c0_i32_0 : i32, i32
  }
  func.func @transform_4(%arg0: i32) -> (i32, i32) {
    %c0_i32 = arith.constant 0 : i32
    %c0_i32_0 = arith.constant 0 : i32
    %c0_i32_1 = arith.constant 0 : i32
    return %c0_i32, %c0_i32_0 : i32, i32
  }
  func.func @transform_5(%arg0: i32) -> (i32, i32) {
    %c0_i32 = arith.constant 0 : i32
    %c0_i32_0 = arith.constant 0 : i32
    return %arg0, %c0_i32 : i32, i32
  }
}

</mosaic_0001>

<llo_original>
// kernel: tpu_custom_call.1
$region0: #{tpu_custom_call.1}
  #allocation0 [shape = 'u32[]', space=smem, size = 0x4, offset = 0x4, fixed_abs, tag = 'smem constant byte address 0x4 - core index']
  #allocation1 [shape = 'u32[144,128]{1,0:T(1,128)}', space=vmem, size = 0x12000, scoped, tag = 'internal scratch']
  %s0 = inlined_call_operand.vmem [shape: f32[64,32], index: 0, kind: input, shape index: {}]
  %s1 = inlined_call_operand.vmem [shape: f32[128,32], index: 1, kind: input, shape index: {}]
  %s2 = inlined_call_operand.vmem [shape: f32[1,128], index: 2, kind: input, shape index: {}]
  %s3 = inlined_call_operand.vmem [shape: f32[4,128], index: 3, kind: input, shape index: {}]
  %s4 = inlined_call_operand.vmem [shape: f32[1,4], index: 4, kind: input, shape index: {}]
  %s5 = inlined_call_operand.vmem [shape: f32[64,4], index: 5, kind: output, shape index: {}]
  %s6 = sld [smem:[#allocation0]]
  $region30: #{tpu_custom_call.1} parent=0
    _
  %s8 = ssub.s32 1, %s6
  %s9 = scalar_select 0, %s8, %s6
  // Predicated region
  $region2: #{tpu_custom_call.1} parent=0 // pred_check
    _
  $region3: #{tpu_custom_call.1} parent=0 // pred_check_branch
    %11 = sbr.rel (0) target = $region5
  $region4: #{tpu_custom_call.1} parent=0 // pred_region
    _
  $region5: #{tpu_custom_call.1} parent=0 // pred_fallthru
    _
  // Predicated region
  $region6: #{tpu_custom_call.1} parent=0 // pred_check
    _
  $region7: #{tpu_custom_call.1} parent=0 // pred_check_branch
    %13 = sbr.rel (0) target = $region9
  $region8: #{tpu_custom_call.1} parent=0 // pred_region
    _
  $region9: #{tpu_custom_call.1} parent=0 // pred_fallthru
    _
  // Predicated region
  $region10: #{tpu_custom_call.1} parent=0 // pred_check
    _
  $region11: #{tpu_custom_call.1} parent=0 // pred_check_branch
    %15 = sbr.rel (0) target = $region13
  $region12: #{tpu_custom_call.1} parent=0 // pred_region
    _
  $region13: #{tpu_custom_call.1} parent=0 // pred_fallthru
    _
  // Predicated region
  $region14: #{tpu_custom_call.1} parent=0 // pred_check
    _
  $region15: #{tpu_custom_call.1} parent=0 // pred_check_branch
    %17 = sbr.rel (0) target = $region17
  $region16: #{tpu_custom_call.1} parent=0 // pred_region
    _
  $region17: #{tpu_custom_call.1} parent=0 // pred_fallthru
    _
  // Predicated region
  $region18: #{tpu_custom_call.1} parent=0 // pred_check
    _
  $region19: #{tpu_custom_call.1} parent=0 // pred_check_branch
    %19 = sbr.rel (0) target = $region21
  $region20: #{tpu_custom_call.1} parent=0 // pred_region
    _
  $region21: #{tpu_custom_call.1} parent=0 // pred_fallthru
    _
  %v20 = vld [vmem:[%s0] sm:$0xff]
  %v21 = vld [vmem:[%s0 + $0x8] sm:$0xff]
  %v22 = vld [vmem:[%s0 + $0x10] sm:$0xff]
  %v23 = vld [vmem:[%s0 + $0x18] sm:$0xff]
  %v24 = vld [vmem:[%s0 + $0x20] sm:$0xff]
  %v25 = vld [vmem:[%s0 + $0x28] sm:$0xff]
  %v26 = vld [vmem:[%s0 + $0x30] sm:$0xff]
  %v27 = vld [vmem:[%s0 + $0x38] sm:$0xff]
  %v28 = vld [vmem:[%s1] sm:$0xff]
  %v29 = vld [vmem:[%s1 + $0x8] sm:$0xff]
  %v30 = vld [vmem:[%s1 + $0x10] sm:$0xff]
  %v31 = vld [vmem:[%s1 + $0x18] sm:$0xff]
  %v32 = vld [vmem:[%s1 + $0x20] sm:$0xff]
  %v33 = vld [vmem:[%s1 + $0x28] sm:$0xff]
  %v34 = vld [vmem:[%s1 + $0x30] sm:$0xff]
  %v35 = vld [vmem:[%s1 + $0x38] sm:$0xff]
  %v36 = vld [vmem:[%s1 + $0x40] sm:$0xff]
  %v37 = vld [vmem:[%s1 + $0x48] sm:$0xff]
  %v38 = vld [vmem:[%s1 + $0x50] sm:$0xff]
  %v39 = vld [vmem:[%s1 + $0x58] sm:$0xff]
  %v40 = vld [vmem:[%s1 + $0x60] sm:$0xff]
  %v41 = vld [vmem:[%s1 + $0x68] sm:$0xff]
  %v42 = vld [vmem:[%s1 + $0x70] sm:$0xff]
  %v43 = vld [vmem:[%s1 + $0x78] sm:$0xff]
  %v44 = vld [vmem:[%s2] sm:$0x1]
  %v46 = vlaneseq
  %v47 = vshrl.u32 %v46, 7
  %v48 = vsub.s32 0, %v47
  %v49 = vrot.slane %v44, %v48
  %vm51 = vcmask 261120
  %v53 = vsel %vm51, %v20, 0
  %v56 = vsel %vm51, %v21, 0
  %v59 = vsel %vm51, %v22, 0
  %v62 = vsel %vm51, %v23, 0
  %v65 = vsel %vm51, %v24, 0
  %v68 = vsel %vm51, %v25, 0
  %v71 = vsel %vm51, %v26, 0
  %v74 = vsel %vm51, %v27, 0
  %v77 = vsel %vm51, %v28, 0
  %v80 = vsel %vm51, %v29, 0
  %v83 = vsel %vm51, %v30, 0
  %v86 = vsel %vm51, %v31, 0
  %v89 = vsel %vm51, %v32, 0
  %v92 = vsel %vm51, %v33, 0
  %v95 = vsel %vm51, %v34, 0
  %v98 = vsel %vm51, %v35, 0
  %v101 = vsel %vm51, %v36, 0
  %v104 = vsel %vm51, %v37, 0
  %v107 = vsel %vm51, %v38, 0
  %v110 = vsel %vm51, %v39, 0
  %v113 = vsel %vm51, %v40, 0
  %v116 = vsel %vm51, %v41, 0
  %v119 = vsel %vm51, %v42, 0
  %v122 = vsel %vm51, %v43, 0
  %124 = vmatprep.subr.mxu0 0.0
  %125 = vmatpush1.xpose.msra.mxu0 %v122
  %126 = vmatprep.subr.mxu0 0.0
  %127 = vmatpush1.xpose.msra.mxu0 %v119
  %128 = vmatprep.subr.mxu0 0.0
  %129 = vmatpush1.xpose.msra.mxu0 %v116
  %130 = vmatprep.subr.mxu0 0.0
  %131 = vmatpush1.xpose.msra.mxu0 %v113
  %132 = vmatprep.subr.mxu0 0.0
  %133 = vmatpush1.xpose.msra.mxu0 %v110
  %134 = vmatprep.subr.mxu0 0.0
  %135 = vmatpush1.xpose.msra.mxu0 %v107
  %136 = vmatprep.subr.mxu0 0.0
  %137 = vmatpush1.xpose.msra.mxu0 %v104
  %138 = vmatprep.subr.mxu0 0.0
  %139 = vmatpush1.xpose.msra.mxu0 %v101
  %140 = vmatprep.subr.mxu0 0.0
  %141 = vmatpush1.xpose.msra.mxu0 %v98
  %142 = vmatprep.subr.mxu0 0.0
  %143 = vmatpush1.xpose.msra.mxu0 %v95
  %144 = vmatprep.subr.mxu0 0.0
  %145 = vmatpush1.xpose.msra.mxu0 %v92
  %146 = vmatprep.subr.mxu0 0.0
  %147 = vmatpush1.xpose.msra.mxu0 %v89
  %148 = vmatprep.subr.mxu0 0.0
  %149 = vmatpush1.xpose.msra.mxu0 %v86
  %150 = vmatprep.subr.mxu0 0.0
  %151 = vmatpush1.xpose.msra.mxu0 %v83
  %152 = vmatprep.subr.mxu0 0.0
  %153 = vmatpush1.xpose.msra.mxu0 %v80
  %154 = vmatprep.subr.mxu0 0.0
  %155 = vmatpush1.xpose.msra.mxu0 %v77
  %156 = vmatprep.subr.mxu0 0.0
  %157 = vmatpush2.xpose.msra.mxu0 0.0
  %158 = vmatprep.subr.mxu0 0.0
  %159 = vmatpush2.xpose.msra.mxu0 0.0
  %160 = vmatprep.subr.mxu0 0.0
  %161 = vmatpush2.xpose.msra.mxu0 0.0
  %162 = vmatprep.subr.mxu0 0.0
  %163 = vmatpush2.xpose.msra.mxu0 0.0
  %164 = vmatprep.subr.mxu0 0.0
  %165 = vmatpush2.xpose.msra.mxu0 0.0
  %166 = vmatprep.subr.mxu0 0.0
  %167 = vmatpush2.xpose.msra.mxu0 0.0
  %168 = vmatprep.subr.mxu0 0.0
  %169 = vmatpush2.xpose.msra.mxu0 0.0
  %170 = vmatprep.subr.mxu0 0.0
  %171 = vmatpush2.xpose.msra.mxu0 0.0
  %172 = vmatprep.subr.mxu0 0.0
  %173 = vmatpush2.xpose.msra.mxu0 0.0
  %174 = vmatprep.subr.mxu0 0.0
  %175 = vmatpush2.xpose.msra.mxu0 0.0
  %176 = vmatprep.subr.mxu0 0.0
  %177 = vmatpush2.xpose.msra.mxu0 0.0
  %178 = vmatprep.subr.mxu0 0.0
  %179 = vmatpush2.xpose.msra.mxu0 0.0
  %180 = vmatprep.subr.mxu0 0.0
  %181 = vmatpush2.xpose.msra.mxu0 0.0
  %182 = vmatprep.subr.mxu0 0.0
  %183 = vmatpush2.xpose.msra.mxu0 0.0
  %184 = vmatprep.subr.mxu0 0.0
  %185 = vmatpush2.xpose.msra.mxu0 0.0
  %186 = vmatprep.subr.mxu0 0.0
  %187 = vmatpush2.xpose.msra.mxu0 0.0
  %188 = vmatprep.mubr.f32.mxu0 0.0
  %189 = vmatmul.mubr.f32.gmra.mxu0 %v53
  %v190 = vpop.f32.mrf.mxu0
  %v191 = vadd.f32 %v49, %v190
  %v192 = vpop.f32.mrf.mxu0
  %193 = vmatprep.mubr.f32.mxu0 0.0
  %194 = vmatmul.mubr.f32.gmra.mxu0 %v56
  %v195 = vpop.f32.mrf.mxu0
  %v196 = vadd.f32 %v49, %v195
  %v197 = vpop.f32.mrf.mxu0
  %198 = vmatprep.mubr.f32.mxu0 0.0
  %199 = vmatmul.mubr.f32.gmra.mxu0 %v59
  %v200 = vpop.f32.mrf.mxu0
  %v201 = vadd.f32 %v49, %v200
  %v202 = vpop.f32.mrf.mxu0
  %203 = vmatprep.mubr.f32.mxu0 0.0
  %204 = vmatmul.mubr.f32.gmra.mxu0 %v62
  %v205 = vpop.f32.mrf.mxu0
  %v206 = vadd.f32 %v49, %v205
  %v207 = vpop.f32.mrf.mxu0
  %208 = vmatprep.mubr.f32.mxu0 0.0
  %209 = vmatmul.mubr.f32.gmra.mxu0 %v65
  %v210 = vpop.f32.mrf.mxu0
  %v211 = vadd.f32 %v49, %v210
  %v212 = vpop.f32.mrf.mxu0
  %213 = vmatprep.mubr.f32.mxu0 0.0
  %214 = vmatmul.mubr.f32.gmra.mxu0 %v68
  %v215 = vpop.f32.mrf.mxu0
  %v216 = vadd.f32 %v49, %v215
  %v217 = vpop.f32.mrf.mxu0
  %218 = vmatprep.mubr.f32.mxu0 0.0
  %219 = vmatmul.mubr.f32.gmra.mxu0 %v71
  %v220 = vpop.f32.mrf.mxu0
  %v221 = vadd.f32 %v49, %v220
  %v222 = vpop.f32.mrf.mxu0
  %223 = vmatprep.mubr.f32.mxu0 0.0
  %224 = vmatmul.mubr.f32.gmra.mxu0 %v74
  %v225 = vpop.f32.mrf.mxu0
  %v226 = vadd.f32 %v49, %v225
  %v227 = vpop.f32.mrf.mxu0
  %228 = vdwg.mxu0
  %v229 = vmax.f32 %v191, 0.0
  %v230 = vmax.f32 %v196, 0.0
  %v231 = vmax.f32 %v201, 0.0
  %v232 = vmax.f32 %v206, 0.0
  %v233 = vmax.f32 %v211, 0.0
  %v234 = vmax.f32 %v216, 0.0
  %v235 = vmax.f32 %v221, 0.0
  %v236 = vmax.f32 %v226, 0.0
  %v237 = vld [vmem:[%s3] sm:$0xf]
  %v238 = vld [vmem:[%s4] sm:$0x1]
  %v240 = vlaneseq
  %v241 = vshrl.u32 %v240, 7
  %v242 = vsub.s32 0, %v241
  %v243 = vrot.slane %v238, %v242
  %245 = vmatprep.subr.mxu0 0.0
  %246 = vmatpush1.xpose.msra.mxu0 0.0
  %247 = vmatprep.subr.mxu0 0.0
  %248 = vmatpush1.xpose.msra.mxu0 0.0
  %249 = vmatprep.subr.mxu0 0.0
  %250 = vmatpush1.xpose.msra.mxu0 0.0
  %251 = vmatprep.subr.mxu0 0.0
  %252 = vmatpush1.xpose.msra.mxu0 0.0
  %253 = vmatprep.subr.mxu0 0.0
  %254 = vmatpush1.xpose.msra.mxu0 0.0
  %255 = vmatprep.subr.mxu0 0.0
  %256 = vmatpush1.xpose.msra.mxu0 0.0
  %257 = vmatprep.subr.mxu0 0.0
  %258 = vmatpush1.xpose.msra.mxu0 0.0
  %259 = vmatprep.subr.mxu0 0.0
  %260 = vmatpush1.xpose.msra.mxu0 0.0
  %261 = vmatprep.subr.mxu0 0.0
  %262 = vmatpush1.xpose.msra.mxu0 0.0
  %263 = vmatprep.subr.mxu0 0.0
  %264 = vmatpush1.xpose.msra.mxu0 0.0
  %265 = vmatprep.subr.mxu0 0.0
  %266 = vmatpush1.xpose.msra.mxu0 0.0
  %267 = vmatprep.subr.mxu0 0.0
  %268 = vmatpush1.xpose.msra.mxu0 0.0
  %269 = vmatprep.subr.mxu0 0.0
  %270 = vmatpush1.xpose.msra.mxu0 0.0
  %271 = vmatprep.subr.mxu0 0.0
  %272 = vmatpush1.xpose.msra.mxu0 0.0
  %273 = vmatprep.subr.mxu0 0.0
  %274 = vmatpush1.xpose.msra.mxu0 0.0
  %275 = vmatprep.subr.mxu0 0.0
  %276 = vmatpush1.xpose.msra.mxu0 %v237
  %277 = vmatprep.subr.mxu0 0.0
  %278 = vmatpush2.xpose.msra.mxu0 0.0
  %279 = vmatprep.subr.mxu0 0.0
  %280 = vmatpush2.xpose.msra.mxu0 0.0
  %281 = vmatprep.subr.mxu0 0.0
  %282 = vmatpush2.xpose.msra.mxu0 0.0
  %283 = vmatprep.subr.mxu0 0.0
  %284 = vmatpush2.xpose.msra.mxu0 0.0
  %285 = vmatprep.subr.mxu0 0.0
  %286 = vmatpush2.xpose.msra.mxu0 0.0
  %287 = vmatprep.subr.mxu0 0.0
  %288 = vmatpush2.xpose.msra.mxu0 0.0
  %289 = vmatprep.subr.mxu0 0.0
  %290 = vmatpush2.xpose.msra.mxu0 0.0
  %291 = vmatprep.subr.mxu0 0.0
  %292 = vmatpush2.xpose.msra.mxu0 0.0
  %293 = vmatprep.subr.mxu0 0.0
  %294 = vmatpush2.xpose.msra.mxu0 0.0
  %295 = vmatprep.subr.mxu0 0.0
  %296 = vmatpush2.xpose.msra.mxu0 0.0
  %297 = vmatprep.subr.mxu0 0.0
  %298 = vmatpush2.xpose.msra.mxu0 0.0
  %299 = vmatprep.subr.mxu0 0.0
  %300 = vmatpush2.xpose.msra.mxu0 0.0
  %301 = vmatprep.subr.mxu0 0.0
  %302 = vmatpush2.xpose.msra.mxu0 0.0
  %303 = vmatprep.subr.mxu0 0.0
  %304 = vmatpush2.xpose.msra.mxu0 0.0
  %305 = vmatprep.subr.mxu0 0.0
  %306 = vmatpush2.xpose.msra.mxu0 0.0
  %307 = vmatprep.subr.mxu0 0.0
  %308 = vmatpush2.xpose.msra.mxu0 0.0
  %309 = vmatprep.mubr.f32.mxu0 0.0
  %310 = vmatmul.mubr.f32.gmra.mxu0 %v229
  %v311 = vpop.f32.mrf.mxu0
  %v312 = vadd.f32 %v243, %v311
  %v313 = vpop.f32.mrf.mxu0
  %314 = vmatprep.mubr.f32.mxu0 0.0
  %315 = vmatmul.mubr.f32.gmra.mxu0 %v230
  %v316 = vpop.f32.mrf.mxu0
  %v317 = vadd.f32 %v243, %v316
  %v318 = vpop.f32.mrf.mxu0
  %319 = vmatprep.mubr.f32.mxu0 0.0
  %320 = vmatmul.mubr.f32.gmra.mxu0 %v231
  %v321 = vpop.f32.mrf.mxu0
  %v322 = vadd.f32 %v243, %v321
  %v323 = vpop.f32.mrf.mxu0
  %324 = vmatprep.mubr.f32.mxu0 0.0
  %325 = vmatmul.mubr.f32.gmra.mxu0 %v232
  %v326 = vpop.f32.mrf.mxu0
  %v327 = vadd.f32 %v243, %v326
  %v328 = vpop.f32.mrf.mxu0
  %329 = vmatprep.mubr.f32.mxu0 0.0
  %330 = vmatmul.mubr.f32.gmra.mxu0 %v233
  %v331 = vpop.f32.mrf.mxu0
  %v332 = vadd.f32 %v243, %v331
  %v333 = vpop.f32.mrf.mxu0
  %334 = vmatprep.mubr.f32.mxu0 0.0
  %335 = vmatmul.mubr.f32.gmra.mxu0 %v234
  %v336 = vpop.f32.mrf.mxu0
  %v337 = vadd.f32 %v243, %v336
  %v338 = vpop.f32.mrf.mxu0
  %339 = vmatprep.mubr.f32.mxu0 0.0
  %340 = vmatmul.mubr.f32.gmra.mxu0 %v235
  %v341 = vpop.f32.mrf.mxu0
  %v342 = vadd.f32 %v243, %v341
  %v343 = vpop.f32.mrf.mxu0
  %344 = vmatprep.mubr.f32.mxu0 0.0
  %345 = vmatmul.mubr.f32.gmra.mxu0 %v236
  %v346 = vpop.f32.mrf.mxu0
  %v347 = vadd.f32 %v243, %v346
  %v348 = vpop.f32.mrf.mxu0
  %349 = vdwg.mxu0
  %vm350 = vcmask 31744
  %351 = vst.msk [vmem:[%s5] sm:$0xff] %vm350, %v312
  %352 = vst.msk [vmem:[%s5 + $0x8] sm:$0xff] %vm350, %v317
  %353 = vst.msk [vmem:[%s5 + $0x10] sm:$0xff] %vm350, %v322
  %354 = vst.msk [vmem:[%s5 + $0x18] sm:$0xff] %vm350, %v327
  %355 = vst.msk [vmem:[%s5 + $0x20] sm:$0xff] %vm350, %v332
  %356 = vst.msk [vmem:[%s5 + $0x28] sm:$0xff] %vm350, %v337
  %357 = vst.msk [vmem:[%s5 + $0x30] sm:$0xff] %vm350, %v342
  %358 = vst.msk [vmem:[%s5 + $0x38] sm:$0xff] %vm350, %v347
  // Predicated region
  $region22: #{tpu_custom_call.1} parent=0 // pred_check
    _
  $region23: #{tpu_custom_call.1} parent=0 // pred_check_branch
    %360 = sbr.rel (0) target = $region25
  $region24: #{tpu_custom_call.1} parent=0 // pred_region
    _
  $region25: #{tpu_custom_call.1} parent=0 // pred_fallthru
    _
  // Predicated region
  $region26: #{tpu_custom_call.1} parent=0 // pred_check
    _
  $region27: #{tpu_custom_call.1} parent=0 // pred_check_branch
    %362 = sbr.rel (0) target = $region29
  $region28: #{tpu_custom_call.1} parent=0 // pred_region
    _
  $region29: #{tpu_custom_call.1} parent=0 // pred_fallthru
    _

</llo_original>
